<compile_context>
chip_gen: v7x
topology: tpu7x:2x2x1
jax: 0.10.0
libtpu: 0.0.40
codegen_flags: <defaults>
</compile_context>

<pallas_src>
import jax
import jax.numpy as jnp
from jax.experimental import pallas as pl
from jax.experimental.pallas import tpu as pltpu


_LANES = 128
_BLOCK_BYTES = 2 * 1024 * 1024  # per-input-block DMA byte budget (~roofline sweet spot)


def _make_kernel(rows, tile_rows, need_row_mask):
    def kernel(pred_ref, label_ref, inter_ref, union_ref):
        # pred_ref / label_ref : (tb, tile_rows, 128) input tile (caller dtype).
        # inter_ref / union_ref: (tb, 128) f32 lane-wise accumulators; the output
        # block is resident across the row-reduction grid axis (axis 1).
        k = pl.program_id(1)

        @pl.when(k == 0)
        def _init():
            inter_ref[...] = jnp.zeros_like(inter_ref)
            union_ref[...] = jnp.zeros_like(union_ref)

        def accumulate(mask_tail_rows):
            # Binary masks in arithmetic form (no eq/and/or/select chain):
            #   inter = sum(p * l), union = sum(max(p, l)).
            p = (pred_ref[...] == 1).astype(jnp.float32)
            l = (label_ref[...] == 1).astype(jnp.float32)
            if mask_tail_rows:  # static: only emitted for the tail-tile branch
                row = jax.lax.broadcasted_iota(jnp.int32, p.shape, 1) + k * tile_rows
                valid = (row < rows).astype(jnp.float32)
                p = p * valid
                l = l * valid
            # Reduce only the row/sublane axis here; the single cross-lane
            # reduce happens in the tiny XLA epilogue. f32 lane partials are
            # exact (each lane partial <= rows < 2^24 for any realistic mask).
            inter_ref[...] += jnp.sum(p * l, axis=1)
            union_ref[...] += jnp.sum(jnp.maximum(p, l), axis=1)

        if need_row_mask:
            # Masking costs ~50% extra VALU work; pay it only on the last step,
            # where the padded tail rows read undefined data.
            last = pl.num_programs(1) - 1

            @pl.when(k < last)
            def _unmasked():
                accumulate(False)

            @pl.when(k == last)
            def _masked():
                accumulate(True)
        else:
            accumulate(False)

    return kernel


def iou_metric(preds, labels, ignore=None, threshold=0.5, block_bytes=_BLOCK_BYTES):
    """Pallas implementation of IoU_metric.forward (ignore must be None)."""
    # TODO(synk): data-dependent `ignore` value not supported; the default
    # ignore=None makes (label != ignore) all-True, so union = (l | p).
    assert ignore is None, "only ignore=None (the default) is implemented"
    assert preds.shape == labels.shape
    B = preds.shape[0]
    n_elem = 1
    for d in preds.shape[1:]:
        n_elem *= d
    assert n_elem % _LANES == 0, "per-sample element count must be lane-divisible"
    rows = n_elem // _LANES

    # No dtype cast here: HBM traffic stays at the caller's dtype width.
    p = preds.reshape(B, rows, _LANES)
    l = labels.reshape(B, rows, _LANES)

    # Dtype-aware row budget so every input block DMA is ~block_bytes.
    # 2 inputs x 2 pipeline buffers x 2 MiB = 8 MiB < v5e's 16 MiB scoped-VMEM
    # default (v6e/v7x have more headroom), so no vmem_limit_bytes override.
    itemsize = max(jnp.dtype(preds.dtype).itemsize, jnp.dtype(labels.dtype).itemsize)
    max_tile_rows = max(8, (block_bytes // (_LANES * itemsize)) // 8 * 8)

    if rows > max_tile_rows:
        # Large samples: one sample per batch block, multi-step row reduction.
        tile_rows = max_tile_rows          # multiple of 8 -> sublane-tile aligned
        tb = 1
    else:
        # Small samples: pack several per grid step up to the byte budget.
        tile_rows = rows                   # == full dim, no alignment constraint
        tb = max(1, max_tile_rows // rows)
        tb = min(tb, B)
        if B >= 2:
            tb = min(tb, B // 2)           # >= 2 batch blocks: keep both v7x TCs busy
    kt = pl.cdiv(rows, tile_rows)
    bt = pl.cdiv(B, tb)                    # B need not divide tb: tail block padded
    need_row_mask = (rows % tile_rows) != 0

    kernel = _make_kernel(rows, tile_rows, need_row_mask)

    inter_p, union_p = pl.pallas_call(
        kernel,
        out_shape=(
            jax.ShapeDtypeStruct((bt, tb, _LANES), jnp.float32),
            jax.ShapeDtypeStruct((bt, tb, _LANES), jnp.float32),
        ),
        grid_spec=pltpu.PrefetchScalarGridSpec(
            num_scalar_prefetch=0,
            grid=(bt, kt),
            in_specs=[
                pl.BlockSpec((tb, tile_rows, _LANES), lambda b, k: (b, k, 0)),
                pl.BlockSpec((tb, tile_rows, _LANES), lambda b, k: (b, k, 0)),
            ],
            out_specs=[
                # Leading dim squeezed: kernel sees (tb, 128); block is resident
                # across the row-reduction axis (index map ignores k).
                pl.BlockSpec((None, tb, _LANES), lambda b, k: (b, 0, 0)),
                pl.BlockSpec((None, tb, _LANES), lambda b, k: (b, 0, 0)),
            ],
        ),
        compiler_params=pltpu.CompilerParams(
            # Batch axis shards across v7x's two TensorCores; the row-reduction
            # axis carries the resident accumulators -> arbitrary.
            dimension_semantics=("parallel", "arbitrary"),
        ),
    )(p, l)

    # Tiny epilogue on lane partials: trim batch padding, cross-lane sum,
    # per-sample IoU, batch mean. (f32 cross-lane sum is exact up to 2^24
    # counts per sample; beyond that the ~1e-7 relative error is irrelevant
    # for an IoU metric.)
    inter = jnp.sum(inter_p.reshape(bt * tb, _LANES)[:B], axis=-1)
    union = jnp.sum(union_p.reshape(bt * tb, _LANES)[:B], axis=-1)
    ious = jnp.where(union > 0, inter / union, 1.0)
    # np.nanmean over the batch; no NaNs can occur -> plain mean.
    return jnp.mean(ious)


def _reference(preds, labels):
    B = preds.shape[0]
    pr = preds.reshape(B, -1)
    lr = labels.reshape(B, -1)
    inter = jnp.sum((lr == 1) & (pr == 1), axis=1).astype(jnp.float32)
    union = jnp.sum((lr == 1) | (pr == 1), axis=1).astype(jnp.float32)
    return jnp.mean(jnp.where(union > 0, inter / union, 1.0))


if __name__ == "__main__":
    key = jax.random.PRNGKey(0)
    k1, k2, k3, k4, k5, k6 = jax.random.split(key, 6)

    # 1) Default f32 path (batch packing, tb capped so both v7x TCs get work).
    shape = (2, 4, 16, 16)  # NCHW
    preds = (jax.random.uniform(k1, shape) > 0.5).astype(jnp.float32)
    labels = (jax.random.uniform(k2, shape) > 0.5).astype(jnp.float32)
    iou = iou_metric(preds, labels)
    jax.block_until_ready(iou)
    assert jnp.allclose(iou, _reference(preds, labels), atol=1e-6), "case 1 mismatch"

    # 2) uint8 inputs, prime batch -> exercises cdiv batch blocking + trim.
    shape2 = (5, 1, 16, 16)
    preds2 = (jax.random.uniform(k3, shape2) > 0.5).astype(jnp.uint8)
    labels2 = (jax.random.uniform(k4, shape2) > 0.5).astype(jnp.uint8)
    iou2 = iou_metric(preds2, labels2)
    jax.block_until_ready(iou2)
    assert jnp.allclose(iou2, _reference(preds2, labels2), atol=1e-6), "case 2 mismatch"

    # 3) Tiny block budget -> multi-step row reduction with last-step tail mask.
    shape3 = (2, 3, 40, 32)  # rows = 30, tile_rows = 8 -> kt = 4, masked tail
    preds3 = (jax.random.uniform(k5, shape3) > 0.5).astype(jnp.float32)
    labels3 = (jax.random.uniform(k6, shape3) > 0.5).astype(jnp.float32)
    iou3 = iou_metric(preds3, labels3, block_bytes=8 * _LANES * 4)
    jax.block_until_ready(iou3)
    assert jnp.allclose(iou3, _reference(preds3, labels3), atol=1e-6), "case 3 mismatch"

    print("KERNEL_OK")
</pallas_src>

<mosaic_0001>
module attributes {stable_mosaic.version = 11 : i64} {
  func.func @kernel(%arg0: i32, %arg1: i32, %arg2: memref<1x8x128xf32, #tpu.memory_space<vmem>>, %arg3: memref<1x8x128xf32, #tpu.memory_space<vmem>>, %arg4: memref<1x1x128xf32, #tpu.memory_space<vmem>>, %arg5: memref<1x1x128xf32, #tpu.memory_space<vmem>>) attributes {dimension_semantics = [#tpu.dimension_semantics<parallel>, #tpu.dimension_semantics<arbitrary>], iteration_bounds = array<i64: 2, 1>, scalar_prefetch = 0 : i64, scratch_operands = 0 : i64, tpu.core_type = #tpu.core_type<tc>, window_params = [{transform_indices = @transform_0, window_bounds = array<i64: 1, 8, 128>}, {transform_indices = @transform_1, window_bounds = array<i64: 1, 8, 128>}, {transform_indices = @transform_2, window_bounds = array<i64: 1, 1, 128>}, {transform_indices = @transform_3, window_bounds = array<i64: 1, 1, 128>}]} {
    %c0_i32 = arith.constant 0 : i32
    %0 = arith.cmpi eq, %arg1, %c0_i32 : i32
    %1 = arith.extui %0 : i1 to i32
    %c0_i32_0 = arith.constant 0 : i32
    %2 = arith.cmpi ne, %1, %c0_i32_0 : i32
    scf.if %2 {
      %cst_21 = arith.constant 0.000000e+00 : f32
      %29 = vector.broadcast %cst_21 : f32 to vector<1x128xf32>
      %c0_22 = arith.constant 0 : index
      %c0_23 = arith.constant 0 : index
      %c0_24 = arith.constant 0 : index
      %30 = vector.load %arg4[%c0_22, %c0_23, %c0_24] : memref<1x1x128xf32, #tpu.memory_space<vmem>>, vector<1x1x128xf32>
      %31 = vector.shape_cast %30 : vector<1x1x128xf32> to vector<1x128xf32>
      %32 = vector.shape_cast %29 : vector<1x128xf32> to vector<1x1x128xf32>
      tpu.vector_store %arg4[%c0_22, %c0_23, %c0_24], %32 {strides = array<i32>} : memref<1x1x128xf32, #tpu.memory_space<vmem>>, vector<1x1x128xf32>,
      %cst_25 = arith.constant 0.000000e+00 : f32
      %33 = vector.broadcast %cst_25 : f32 to vector<1x128xf32>
      %c0_26 = arith.constant 0 : index
      %c0_27 = arith.constant 0 : index
      %c0_28 = arith.constant 0 : index
      %34 = vector.load %arg5[%c0_26, %c0_27, %c0_28] : memref<1x1x128xf32, #tpu.memory_space<vmem>>, vector<1x1x128xf32>
      %35 = vector.shape_cast %34 : vector<1x1x128xf32> to vector<1x128xf32>
      %36 = vector.shape_cast %33 : vector<1x128xf32> to vector<1x1x128xf32>
      tpu.vector_store %arg5[%c0_26, %c0_27, %c0_28], %36 {strides = array<i32>} : memref<1x1x128xf32, #tpu.memory_space<vmem>>, vector<1x1x128xf32>,
    } else {
    }
    %c0 = arith.constant 0 : index
    %c0_1 = arith.constant 0 : index
    %c0_2 = arith.constant 0 : index
    %3 = vector.load %arg2[%c0, %c0_1, %c0_2] : memref<1x8x128xf32, #tpu.memory_space<vmem>>, vector<1x8x128xf32>
    %cst = arith.constant 1.000000e+00 : f32
    %4 = vector.broadcast %cst : f32 to vector<1x8x128xf32>
    %5 = arith.cmpf oeq, %3, %4 : vector<1x8x128xf32>
    %6 = arith.extui %5 : vector<1x8x128xi1> to vector<1x8x128xi32>
    %7 = arith.sitofp %6 : vector<1x8x128xi32> to vector<1x8x128xf32>
    %c0_3 = arith.constant 0 : index
    %c0_4 = arith.constant 0 : index
    %c0_5 = arith.constant 0 : index
    %8 = vector.load %arg3[%c0_3, %c0_4, %c0_5] : memref<1x8x128xf32, #tpu.memory_space<vmem>>, vector<1x8x128xf32>
    %cst_6 = arith.constant 1.000000e+00 : f32
    %9 = vector.broadcast %cst_6 : f32 to vector<1x8x128xf32>
    %10 = arith.cmpf oeq, %8, %9 : vector<1x8x128xf32>
    %11 = arith.extui %10 : vector<1x8x128xi1> to vector<1x8x128xi32>
    %12 = arith.sitofp %11 : vector<1x8x128xi32> to vector<1x8x128xf32>
    %c0_7 = arith.constant 0 : index
    %c0_8 = arith.constant 0 : index
    %c0_9 = arith.constant 0 : index
    %13 = vector.load %arg4[%c0_7, %c0_8, %c0_9] : memref<1x1x128xf32, #tpu.memory_space<vmem>>, vector<1x1x128xf32>
    %14 = vector.shape_cast %13 : vector<1x1x128xf32> to vector<1x128xf32>
    %15 = arith.mulf %7, %12 : vector<1x8x128xf32>
    %cst_10 = arith.constant dense<0.000000e+00> : vector<1x128xf32>
    %16 = vector.multi_reduction <add>, %15, %cst_10 [1] : vector<1x8x128xf32> to vector<1x128xf32>
    %17 = arith.addf %14, %16 : vector<1x128xf32>
    %c0_11 = arith.constant 0 : index
    %c0_12 = arith.constant 0 : index
    %c0_13 = arith.constant 0 : index
    %18 = vector.load %arg4[%c0_11, %c0_12, %c0_13] : memref<1x1x128xf32, #tpu.memory_space<vmem>>, vector<1x1x128xf32>
    %19 = vector.shape_cast %18 : vector<1x1x128xf32> to vector<1x128xf32>
    %20 = vector.shape_cast %17 : vector<1x128xf32> to vector<1x1x128xf32>
    tpu.vector_store %arg4[%c0_11, %c0_12, %c0_13], %20 {strides = array<i32>} : memref<1x1x128xf32, #tpu.memory_space<vmem>>, vector<1x1x128xf32>,
    %c0_14 = arith.constant 0 : index
    %c0_15 = arith.constant 0 : index
    %c0_16 = arith.constant 0 : index
    %21 = vector.load %arg5[%c0_14, %c0_15, %c0_16] : memref<1x1x128xf32, #tpu.memory_space<vmem>>, vector<1x1x128xf32>
    %22 = vector.shape_cast %21 : vector<1x1x128xf32> to vector<1x128xf32>
    %23 = arith.maximumf %7, %12 : vector<1x8x128xf32>
    %cst_17 = arith.constant dense<0.000000e+00> : vector<1x128xf32>
    %24 = vector.multi_reduction <add>, %23, %cst_17 [1] : vector<1x8x128xf32> to vector<1x128xf32>
    %25 = arith.addf %22, %24 : vector<1x128xf32>
    %c0_18 = arith.constant 0 : index
    %c0_19 = arith.constant 0 : index
    %c0_20 = arith.constant 0 : index
    %26 = vector.load %arg5[%c0_18, %c0_19, %c0_20] : memref<1x1x128xf32, #tpu.memory_space<vmem>>, vector<1x1x128xf32>
    %27 = vector.shape_cast %26 : vector<1x1x128xf32> to vector<1x128xf32>
    %28 = vector.shape_cast %25 : vector<1x128xf32> to vector<1x1x128xf32>
    tpu.vector_store %arg5[%c0_18, %c0_19, %c0_20], %28 {strides = array<i32>} : memref<1x1x128xf32, #tpu.memory_space<vmem>>, vector<1x1x128xf32>,
    return
  }
  func.func @transform_0(%arg0: i32, %arg1: i32) -> (i32, i32, i32) {
    %c0_i32 = arith.constant 0 : i32
    %c0_i32_0 = arith.constant 0 : i32
    return %arg0, %arg1, %c0_i32 : i32, i32, i32
  }
  func.func @transform_1(%arg0: i32, %arg1: i32) -> (i32, i32, i32) {
    %c0_i32 = arith.constant 0 : i32
    %c0_i32_0 = arith.constant 0 : i32
    return %arg0, %arg1, %c0_i32 : i32, i32, i32
  }
  func.func @transform_2(%arg0: i32, %arg1: i32) -> (i32, i32, i32) {
    %c0_i32 = arith.constant 0 : i32
    %c0_i32_0 = arith.constant 0 : i32
    %c0_i32_1 = arith.constant 0 : i32
    return %arg0, %c0_i32, %c0_i32_0 : i32, i32, i32
  }
  func.func @transform_3(%arg0: i32, %arg1: i32) -> (i32, i32, i32) {
    %c0_i32 = arith.constant 0 : i32
    %c0_i32_0 = arith.constant 0 : i32
    %c0_i32_1 = arith.constant 0 : i32
    return %arg0, %c0_i32, %c0_i32_0 : i32, i32, i32
  }
}

</mosaic_0001>

<llo_original>
// kernel: tpu_custom_call.1
$region0: #{tpu_custom_call.1}
  #allocation0 [shape = 'u32[]', space=smem, size = 0x4, offset = 0x4, fixed_abs, tag = 'smem constant byte address 0x4 - core index']
  #allocation1 [shape = 'u32[144,128]{1,0:T(1,128)}', space=vmem, size = 0x12000, scoped, tag = 'internal scratch']
  %s0 = inlined_call_operand.hbm [shape: f32[2,8,128], index: 0, kind: input, shape index: {}]
  %s1 = inlined_call_operand.hbm [shape: f32[2,8,128], index: 1, kind: input, shape index: {}]
  %s2 = inlined_call_operand.hbm [shape: f32[2,1,128], index: 2, kind: output, shape index: {0}]
  %s3 = inlined_call_operand.hbm [shape: f32[2,1,128], index: 3, kind: output, shape index: {1}]
  %4 = xla_tuple %s2, %s3
  %s5 = sld [smem:[#allocation0]]
  $region61: #{tpu_custom_call.1} parent=0
    _
  %s7 = ssub.s32 1, %s5
  %s8 = scalar_select 0, %s7, %s5
  $region1: #{tpu_custom_call.1} parent=0
    #allocation2 [shape = 'u8[8192]{0}', space=vmem, size = 0x2000, scoped, tag = 'input window, operand 0']
    #allocation3 [shape = 's32[2]{0}', space=sflag, size = 0x8, scoped, tag = 'scoped memory for tpu_custom_call.1']
    #allocation4 [shape = 's32[2]{0}', space=sflag, size = 0x8, scoped, tag = 'scoped memory for tpu_custom_call.1']
    #allocation5 [shape = 'u8[8192]{0}', space=vmem, size = 0x2000, scoped, tag = 'input window, operand 1']
    #allocation6 [shape = 's32[2]{0}', space=sflag, size = 0x8, scoped, tag = 'scoped memory for tpu_custom_call.1']
    #allocation7 [shape = 'u8[1024]{0}', space=vmem, size = 0x400, scoped, tag = 'output window, operand 0']
    #allocation8 [shape = 'u8[1024]{0}', space=vmem, size = 0x400, scoped, tag = 'output window, operand 1']
    #allocation9 [shape = 's32[2]{0}', space=sflag, size = 0x8, scoped, tag = 'scoped memory for tpu_custom_call.1']
    %9 = vsyncpa [#allocation3], 0
    %s10 = scalar_lea.sflag [#allocation3], 1
    %11 = vsyncpa %s10, 0
    %12 = vsyncpa [#allocation6], 0
    %s13 = scalar_lea.sflag [#allocation6], 1
    %14 = vsyncpa %s13, 0
    %15 = vsyncpa [#allocation4], 0
    %s16 = scalar_lea.sflag [#allocation4], 1
    %17 = vsyncpa %s16, 0
    %18 = vsyncpa [#allocation9], 0
    %s19 = scalar_lea.sflag [#allocation9], 1
    %20 = vsyncpa %s19, 0
    loop: start=0, step=1, limit=4
    $region2: #{tpu_custom_call.1} parent=1 // loop_pre_header
      _
    $region3: #{tpu_custom_call.1} parent=1 // loop_header
      %s22 = sphi 0, %s26
      %p23 = scmp.ge.s32.totalorder %s22, 4
      %s29 = sphi 0, %s41
      %s30 = sphi 0, %s37
      %s31 = sphi 0, %s29
      %s32 = sphi 0, %s30
      %s33 = sphi 0, %s31
      %s34 = sphi 0, %s32
      %s46 = sphi 0, %s48
      %s49 = sphi 0, %s46
      %s50 = sphi 0, %s49
      %s66 = sphi 0, %s50
      %s74 = sphi 0, %s76
      %s77 = sphi 0, %s74
      %s78 = sphi 0, %s77
      %s94 = sphi 0, %s78
      %s100 = sphi 0, %s102
      %s103 = sphi 0, %s100
      %s104 = sphi 0, %s103
      %s120 = sphi 0, %s104
      %s126 = sphi 0, %s128
      %s129 = sphi 0, %s126
      %s130 = sphi 0, %s129
      %s146 = sphi 0, %s130
    $region4: #{tpu_custom_call.1} parent=1 // loop_header_branch
      %25 = sbr.rel (%p23) target = $region8
    $region5: #{tpu_custom_call.1} parent=1 // loop_body
      %s27 = ssub.s32 %s22, 1
      %s28 = ssub.s32 %s22, 2
      %s35 = sadd.s32 1, %s30
      %p36 = scmp.ge.s32.totalorder %s35, 1
      %s37 = scalar_select %p36, 0, %s35
      %s38 = sadd.s32 1, %s29
      %s39 = scalar_select %p36, %s38, %s29
      %p40 = scmp.ge.s32.totalorder %s39, 2
      %s41 = scalar_select %p40, 0, %s39
      %s42 = ssub.s32 %s29, %s41
      %s43 = ssub.s32 %s30, %s37
      %s44 = sor.u32 %s42, %s43
      %p45 = scmp.eq.s32.totalorder %s44, 0
      %s47 = sadd.s32 %s46, 1
      %s48 = scalar_select %p45, %s46, %s47
      %p51 = pneg %p45
      %p52 = scmp.eq.s32.totalorder %s22, 1
      %p53 = por %p51, %p52
      %p54 = scmp.ne.s32.totalorder %s46, %s49
      %p55 = scmp.eq.s32.totalorder %s22, 0
      %p56 = por %p54, %p55
      %p57 = scmp.ne.s32.totalorder %s46, %s49
      %p58 = scmp.eq.s32.totalorder %s27, 1
      %p59 = por %p57, %p58
      %p60 = scmp.ne.s32.totalorder %s49, %s50
      %p61 = scmp.eq.s32.totalorder %s27, 0
      %p62 = por %p60, %p61
      %p63 = scmp.ne.s32.totalorder %s49, %s50
      %p64 = scmp.eq.s32.totalorder %s28, 1
      %p65 = por %p63, %p64
      %p67 = scmp.ne.s32.totalorder %s50, %s66
      %p68 = scmp.eq.s32.totalorder %s28, 0
      %p69 = por %p67, %p68
      %s70 = ssub.s32 %s29, %s41
      %s71 = ssub.s32 %s30, %s37
      %s72 = sor.u32 %s70, %s71
      %p73 = scmp.eq.s32.totalorder %s72, 0
      %s75 = sadd.s32 %s74, 1
      %s76 = scalar_select %p73, %s74, %s75
      %p79 = pneg %p73
      %p80 = scmp.eq.s32.totalorder %s22, 1
      %p81 = por %p79, %p80
      %p82 = scmp.ne.s32.totalorder %s74, %s77
      %p83 = scmp.eq.s32.totalorder %s22, 0
      %p84 = por %p82, %p83
      %p85 = scmp.ne.s32.totalorder %s74, %s77
      %p86 = scmp.eq.s32.totalorder %s27, 1
      %p87 = por %p85, %p86
      %p88 = scmp.ne.s32.totalorder %s77, %s78
      %p89 = scmp.eq.s32.totalorder %s27, 0
      %p90 = por %p88, %p89
      %p91 = scmp.ne.s32.totalorder %s77, %s78
      %p92 = scmp.eq.s32.totalorder %s28, 1
      %p93 = por %p91, %p92
      %p95 = scmp.ne.s32.totalorder %s78, %s94
      %p96 = scmp.eq.s32.totalorder %s28, 0
      %p97 = por %p95, %p96
      %s98 = ssub.s32 %s29, %s41
      %p99 = scmp.eq.s32.totalorder %s98, 0
      %s101 = sadd.s32 %s100, 1
      %s102 = scalar_select %p99, %s100, %s101
      %p105 = pneg %p99
      %p106 = scmp.eq.s32.totalorder %s22, 1
      %p107 = por %p105, %p106
      %p108 = scmp.ne.s32.totalorder %s100, %s103
      %p109 = scmp.eq.s32.totalorder %s22, 0
      %p110 = por %p108, %p109
      %p111 = scmp.ne.s32.totalorder %s100, %s103
      %p112 = scmp.eq.s32.totalorder %s27, 1
      %p113 = por %p111, %p112
      %p114 = scmp.ne.s32.totalorder %s103, %s104
      %p115 = scmp.eq.s32.totalorder %s27, 0
      %p116 = por %p114, %p115
      %p117 = scmp.ne.s32.totalorder %s103, %s104
      %p118 = scmp.eq.s32.totalorder %s28, 1
      %p119 = por %p117, %p118
      %p121 = scmp.ne.s32.totalorder %s104, %s120
      %p122 = scmp.eq.s32.totalorder %s28, 0
      %p123 = por %p121, %p122
      %s124 = ssub.s32 %s29, %s41
      %p125 = scmp.eq.s32.totalorder %s124, 0
      %s127 = sadd.s32 %s126, 1
      %s128 = scalar_select %p125, %s126, %s127
      %p131 = pneg %p125
      %p132 = scmp.eq.s32.totalorder %s22, 1
      %p133 = por %p131, %p132
      %p134 = scmp.ne.s32.totalorder %s126, %s129
      %p135 = scmp.eq.s32.totalorder %s22, 0
      %p136 = por %p134, %p135
      %p137 = scmp.ne.s32.totalorder %s126, %s129
      %p138 = scmp.eq.s32.totalorder %s27, 1
      %p139 = por %p137, %p138
      %p140 = scmp.ne.s32.totalorder %s129, %s130
      %p141 = scmp.eq.s32.totalorder %s27, 0
      %p142 = por %p140, %p141
      %p143 = scmp.ne.s32.totalorder %s129, %s130
      %p144 = scmp.eq.s32.totalorder %s28, 1
      %p145 = por %p143, %p144
      %p147 = scmp.ne.s32.totalorder %s130, %s146
      %p148 = scmp.eq.s32.totalorder %s28, 0
      %p149 = por %p147, %p148
      %p150 = scmp.le.s32.totalorder 1, %s22
      %p151 = scmp.lt.s32.totalorder %s22, 3
      %p152 = pnand %p150, %p151
      %p153 = pneg %p152
      // Predicated region
      $region9: #{tpu_custom_call.1} parent=5 // pred_check
        _
      $region10: #{tpu_custom_call.1} parent=5 // pred_check_branch
        %155 = sbr.rel (%p152) target = $region12
      $region11: #{tpu_custom_call.1} parent=5 // pred_region
        %s156 = ssub.s32 %s22, 1
      $region12: #{tpu_custom_call.1} parent=5 // pred_fallthru
        _
      %p157 = scmp.lt.s32.totalorder %s22, 2
      // Predicated region
      $region13: #{tpu_custom_call.1} parent=5 // pred_check
        %p158 = pneg %p157
      $region14: #{tpu_custom_call.1} parent=5 // pred_check_branch
        %160 = sbr.rel (%p158) target = $region16
      $region15: #{tpu_custom_call.1} parent=5 // pred_region
        // Predicated region
        $region17: #{tpu_custom_call.1} parent=15 // pred_check
          %p161 = pneg %p56
        $region18: #{tpu_custom_call.1} parent=15 // pred_check_branch
          %163 = sbr.rel (%p161) target = $region20
        $region19: #{tpu_custom_call.1} parent=15 // pred_region
          %s164 = sand.u32 %s46, 1
          %s165 = scalar_lea.sflag [#allocation3], %s164
          %s166 = sand.u32 %s46, 1
          %s167 = smul.addr %s166, 8
          %s168 = scalar_lea.vmem [#allocation2], %s167
          %s170 = ssub.s32 128, 128
          %171 = vsyncadd %s165, %s170
          %s172 = sadd.s32 %s30, %s29
          %s173 = smul.addr %s172, 128
          %s174 = scalar_lea.hbm %s0, %s173
          %s176 = sshll.u32 %s168, 4
          %s177 = int_to_ptr.vmem [resolvable:$true] %s176
          %179 = dma.hbm_to_vmem [thread:$0]  %s174, 128, %s177, %s165
        $region20: #{tpu_custom_call.1} parent=15 // pred_fallthru
          _
        // Predicated region
        $region21: #{tpu_custom_call.1} parent=15 // pred_check
          %p180 = pneg %p84
        $region22: #{tpu_custom_call.1} parent=15 // pred_check_branch
          %182 = sbr.rel (%p180) target = $region24
        $region23: #{tpu_custom_call.1} parent=15 // pred_region
          %s183 = sand.u32 %s74, 1
          %s184 = scalar_lea.sflag [#allocation6], %s183
          %s185 = sand.u32 %s74, 1
          %s186 = smul.addr %s185, 8
          %s187 = scalar_lea.vmem [#allocation5], %s186
          %s189 = ssub.s32 128, 128
          %190 = vsyncadd %s184, %s189
          %s191 = sadd.s32 %s30, %s29
          %s192 = smul.addr %s191, 128
          %s193 = scalar_lea.hbm %s1, %s192
          %s195 = sshll.u32 %s187, 4
          %s196 = int_to_ptr.vmem [resolvable:$true] %s195
          %198 = dma.hbm_to_vmem [thread:$0]  %s193, 128, %s196, %s184
        $region24: #{tpu_custom_call.1} parent=15 // pred_fallthru
          _
      $region16: #{tpu_custom_call.1} parent=5 // pred_fallthru
        _
      %p199 = scmp.le.s32.totalorder 1, %s22
      %p200 = scmp.lt.s32.totalorder %s22, 3
      %p201 = pnand %p199, %p200
      %p202 = pneg %p201
      // Predicated region
      $region25: #{tpu_custom_call.1} parent=5 // pred_check
        _
      $region26: #{tpu_custom_call.1} parent=5 // pred_check_branch
        %204 = sbr.rel (%p201) target = $region28
      $region27: #{tpu_custom_call.1} parent=5 // pred_region
        %s205 = ssub.s32 %s22, 1
        %s206 = sand.u32 %s49, 1
        %s207 = scalar_lea.sflag [#allocation3], %s206
        %s208 = sand.u32 %s49, 1
        %s209 = smul.addr %s208, 8
        %s210 = scalar_lea.vmem [#allocation2], %s209
        // Predicated region
        $region29: #{tpu_custom_call.1} parent=27 // pred_check
          %p211 = pneg %p62
        $region30: #{tpu_custom_call.1} parent=27 // pred_check_branch
          %213 = sbr.rel (%p211) target = $region32
        $region31: #{tpu_custom_call.1} parent=27 // pred_region
          %214 = dma.done %s207, 128
        $region32: #{tpu_custom_call.1} parent=27 // pred_fallthru
          _
        %s215 = sand.u32 %s77, 1
        %s216 = scalar_lea.sflag [#allocation6], %s215
        %s217 = sand.u32 %s77, 1
        %s218 = smul.addr %s217, 8
        %s219 = scalar_lea.vmem [#allocation5], %s218
        // Predicated region
        $region33: #{tpu_custom_call.1} parent=27 // pred_check
          %p220 = pneg %p90
        $region34: #{tpu_custom_call.1} parent=27 // pred_check_branch
          %222 = sbr.rel (%p220) target = $region36
        $region35: #{tpu_custom_call.1} parent=27 // pred_region
          %223 = dma.done %s216, 128
        $region36: #{tpu_custom_call.1} parent=27 // pred_fallthru
          _
        %s224 = sand.u32 %s49, 1
        %s225 = scalar_lea.sflag [#allocation3], %s224
        %s226 = sand.u32 %s49, 1
        %s227 = smul.addr %s226, 8
        %s228 = scalar_lea.vmem [#allocation2], %s227
        %p229 = pneg %p62
        %p230 = pneg %p59
        %s231 = sand.u32 %s77, 1
        %s232 = scalar_lea.sflag [#allocation6], %s231
        %s233 = sand.u32 %s77, 1
        %s234 = smul.addr %s233, 8
        %s235 = scalar_lea.vmem [#allocation5], %s234
        %p236 = pneg %p90
        %p237 = pneg %p87
        %p238 = pneg %p116
        %p239 = pneg %p113
        %s240 = sand.u32 %s103, 1
        %s241 = scalar_lea.sflag [#allocation4], %s240
        %s242 = sand.u32 %s103, 1
        %s243 = scalar_lea.vmem [#allocation7], %s242
        %p244 = pneg %p142
        %p245 = pneg %p139
        %s246 = sand.u32 %s129, 1
        %s247 = scalar_lea.sflag [#allocation9], %s246
        %s248 = sand.u32 %s129, 1
        %s249 = scalar_lea.vmem [#allocation8], %s248
        %p250 = scmp.eq.s32.totalorder %s32, 0
        // Predicated region
        $region37: #{tpu_custom_call.1} parent=27 // pred_check
          %p251 = pneg %p250
        $region38: #{tpu_custom_call.1} parent=27 // pred_check_branch
          %253 = sbr.rel (%p251) target = $region40
        $region39: #{tpu_custom_call.1} parent=27 // pred_region
          %254 = vst [vmem:[%s243] sm:$0x1] 0.0
          %255 = vst [vmem:[%s249] sm:$0x1] 0.0
        $region40: #{tpu_custom_call.1} parent=27 // pred_fallthru
          _
        %v256 = vld [vmem:[%s210] sm:$0xff]
        %vm257 = vcmp.eq.f32.partialorder %v256, 1.0
        %v258 = vsel %vm257, 1, 0
        %v259 = vcvt.s32.f32 %v258
        %v260 = vld [vmem:[%s219] sm:$0xff]
        %vm261 = vcmp.eq.f32.partialorder %v260, 1.0
        %v262 = vsel %vm261, 1, 0
        %v263 = vcvt.s32.f32 %v262
        %v264 = vld [vmem:[%s243] sm:$0x1]
        %v265 = vmul.f32 %v259, %v263
        %v266 = vrot.slane %v265, 4
        %v267 = vadd.f32 %v265, %v266
        %v268 = vrot.slane %v267, 2
        %v269 = vadd.f32 %v267, %v268
        %v270 = vrot.slane %v269, 1
        %v271 = vadd.f32 %v269, %v270
        %v272 = vadd.f32 %v264, %v271
        %273 = vst [vmem:[%s243] sm:$0x1] %v272
        %v274 = vld [vmem:[%s249] sm:$0x1]
        %v275 = vmax.f32 %v259, %v263
        %v276 = vrot.slane %v275, 4
        %v277 = vadd.f32 %v275, %v276
        %v278 = vrot.slane %v277, 2
        %v279 = vadd.f32 %v277, %v278
        %v280 = vrot.slane %v279, 1
        %v281 = vadd.f32 %v279, %v280
        %v282 = vadd.f32 %v274, %v281
        %283 = vst [vmem:[%s249] sm:$0x1] %v282
        %s284 = sand.u32 %s103, 1
        %s285 = scalar_lea.sflag [#allocation4], %s284
        %s286 = sand.u32 %s103, 1
        %s287 = scalar_lea.vmem [#allocation7], %s286
        %s288 = sand.u32 %s129, 1
        %s289 = scalar_lea.sflag [#allocation9], %s288
        %s290 = sand.u32 %s129, 1
        %s291 = scalar_lea.vmem [#allocation8], %s290
        // Predicated region
        $region41: #{tpu_custom_call.1} parent=27 // pred_check
          %p292 = pneg %p113
        $region42: #{tpu_custom_call.1} parent=27 // pred_check_branch
          %294 = sbr.rel (%p292) target = $region44
        $region43: #{tpu_custom_call.1} parent=27 // pred_region
          %s296 = ssub.s32 16, 16
          %297 = vsyncadd %s285, %s296
          %s298 = smul.addr %s31, 16
          %s299 = scalar_lea.hbm %s2, %s298
          %s301 = sshll.u32 %s287, 4
          %s302 = int_to_ptr.vmem [resolvable:$true] %s301
          %304 = dma.vmem_to_hbm [thread:$0]  %s302, 16, %s299, %s285
        $region44: #{tpu_custom_call.1} parent=27 // pred_fallthru
          _
        // Predicated region
        $region45: #{tpu_custom_call.1} parent=27 // pred_check
          %p305 = pneg %p139
        $region46: #{tpu_custom_call.1} parent=27 // pred_check_branch
          %307 = sbr.rel (%p305) target = $region48
        $region47: #{tpu_custom_call.1} parent=27 // pred_region
          %s309 = ssub.s32 16, 16
          %310 = vsyncadd %s289, %s309
          %s311 = smul.addr %s31, 16
          %s312 = scalar_lea.hbm %s3, %s311
          %s314 = sshll.u32 %s291, 4
          %s315 = int_to_ptr.vmem [resolvable:$true] %s314
          %317 = dma.vmem_to_hbm [thread:$0]  %s315, 16, %s312, %s289
        $region48: #{tpu_custom_call.1} parent=27 // pred_fallthru
          _
      $region28: #{tpu_custom_call.1} parent=5 // pred_fallthru
        _
      %p318 = scmp.le.s32.totalorder 2, %s22
      // Predicated region
      $region49: #{tpu_custom_call.1} parent=5 // pred_check
        %p319 = pneg %p318
      $region50: #{tpu_custom_call.1} parent=5 // pred_check_branch
        %321 = sbr.rel (%p319) target = $region52
      $region51: #{tpu_custom_call.1} parent=5 // pred_region
        %s322 = ssub.s32 %s22, 2
        // Predicated region
        $region53: #{tpu_custom_call.1} parent=51 // pred_check
          %p323 = pneg %p119
        $region54: #{tpu_custom_call.1} parent=51 // pred_check_branch
          %325 = sbr.rel (%p323) target = $region56
        $region55: #{tpu_custom_call.1} parent=51 // pred_region
          %s326 = sand.u32 %s104, 1
          %s327 = scalar_lea.sflag [#allocation4], %s326
          %s328 = sand.u32 %s104, 1
          %s329 = scalar_lea.vmem [#allocation7], %s328
          %330 = dma.done %s327, 16
        $region56: #{tpu_custom_call.1} parent=51 // pred_fallthru
          _
        // Predicated region
        $region57: #{tpu_custom_call.1} parent=51 // pred_check
          %p331 = pneg %p145
        $region58: #{tpu_custom_call.1} parent=51 // pred_check_branch
          %333 = sbr.rel (%p331) target = $region60
        $region59: #{tpu_custom_call.1} parent=51 // pred_region
          %s334 = sand.u32 %s130, 1
          %s335 = scalar_lea.sflag [#allocation9], %s334
          %s336 = sand.u32 %s130, 1
          %s337 = scalar_lea.vmem [#allocation8], %s336
          %338 = dma.done %s335, 16
        $region60: #{tpu_custom_call.1} parent=51 // pred_fallthru
          _
      $region52: #{tpu_custom_call.1} parent=5 // pred_fallthru
        _
    $region6: #{tpu_custom_call.1} parent=1 // loop_footer
      %s26 = sadd.s32 1, %s22
    $region7: #{tpu_custom_call.1} parent=1 // loop_footer_branch
      %21 = sbr.rel target = $region3
    $region8: #{tpu_custom_call.1} parent=1 // loop_exit
      _
    %339 = vsyncpa [#allocation3], 1
    %s340 = scalar_lea.sflag [#allocation3], 1
    %341 = vsyncpa %s340, 1
    %342 = vsyncpa [#allocation6], 1
    %s343 = scalar_lea.sflag [#allocation6], 1
    %344 = vsyncpa %s343, 1
    %345 = vsyncpa [#allocation4], 1
    %s346 = scalar_lea.sflag [#allocation4], 1
    %347 = vsyncpa %s346, 1
    %348 = vsyncpa [#allocation9], 1
    %s349 = scalar_lea.sflag [#allocation9], 1
    %350 = vsyncpa %s349, 1

</llo_original>
